<compile_context>
chip_gen: v6e
topology: v6e:2x2x1
jax: 0.10.0
libtpu: 0.0.40
codegen_flags: <defaults>
</compile_context>

<pallas_src>
import functools
import math

import jax
import jax.numpy as jnp
from jax.experimental import pallas as pl
from jax.experimental.pallas import tpu as pltpu

IGNORE_INDEX = -100

_LANE = 128
_SUBLANE = 8
_TARGET_BLOCK_BYTES = 4 * 1024 * 1024  # per logits buffer (f32, sublane-padded C)


def _round_up(x, m):
    return (x + m - 1) // m * m


def _choose_hw_tile(hw, c):
    """Pick the H*W tile width: multiple of 128, ~4 MiB of f32 logits per block."""
    c_padded = _round_up(max(c, 1), _SUBLANE)
    max_thw = max(_LANE, (_TARGET_BLOCK_BYTES // (4 * c_padded)) // _LANE * _LANE)
    return min(max_thw, _round_up(hw, _LANE))


def _ce_class_reduce_kernel(x_ref, lab_ref, sum_ref, cnt_ref, *, hw):
    """One (1, C, THW) logits tile + (1, 1, THW) labels tile.

    Per-element CE (log-softmax over the sublane/class axis) scattered into
    per-class (sum, count) accumulators resident across the inner grid axis.
    """
    @pl.when(pl.program_id(1) == 0)
    def _():
        sum_ref[...] = jnp.zeros_like(sum_ref)
        cnt_ref[...] = jnp.zeros_like(cnt_ref)

    logits = x_ref[0].astype(jnp.float32)        # (C, THW), f32 compute
    labels = lab_ref[0]                          # (1, THW) int32
    c, thw = logits.shape

    # Global column index -> mask the ragged tail of the last H*W tile
    # (also kills any garbage labels/logits read past the array bounds).
    col = jax.lax.broadcasted_iota(jnp.int32, (1, thw), 1) + pl.program_id(1) * thw
    col_valid = col < hw                                             # (1, THW)

    class_ids = jax.lax.broadcasted_iota(jnp.int32, (c, thw), 0)
    onehot = (class_ids == labels) & col_valid                       # (C, THW)
    # ignore_index (-100) never matches a class id, so those columns drop out.

    # Numerically stable log-softmax CE over the class (sublane) axis.
    m = jnp.max(logits, axis=0, keepdims=True)                       # (1, THW)
    lse = m + jnp.log(jnp.sum(jnp.exp(logits - m), axis=0, keepdims=True))
    picked = jnp.sum(jnp.where(onehot, logits, 0.0), axis=0, keepdims=True)
    loss = jnp.where(col_valid, lse - picked, 0.0)                   # (1, THW)

    onehot_f = onehot.astype(jnp.float32)
    # TODO(synk): on v7x these two lane-reductions could be fused into one MXU
    # dot (onehot @ [loss; ones]) if the kernel ever becomes VPU/XLU-bound.
    sum_ref[0] += jnp.sum(onehot_f * loss, axis=1, keepdims=True)    # (C, 1)
    cnt_ref[0] += jnp.sum(onehot_f, axis=1, keepdims=True)           # (C, 1)


@functools.partial(jax.jit, static_argnames=("ignore_index",))
def ce_loss(output, labels, ignore_index=IGNORE_INDEX):
    """output: (N, C, *spatial) float; labels: (N, 1, *spatial) int."""
    n, c = output.shape[:2]
    hw = int(math.prod(output.shape[2:])) if output.ndim > 2 else 1
    x = output.reshape(n, c, hw)                       # free reshape, no transpose
    lab = labels.reshape(n, 1, hw).astype(jnp.int32)   # lane-dense labels

    thw = _choose_hw_tile(hw, c)
    n_hw_tiles = pl.cdiv(hw, thw)

    kernel = functools.partial(_ce_class_reduce_kernel, hw=hw)
    sums, cnts = pl.pallas_call(
        kernel,
        out_shape=(
            jax.ShapeDtypeStruct((n, c, 1), jnp.float32),
            jax.ShapeDtypeStruct((n, c, 1), jnp.float32),
        ),
        grid_spec=pltpu.PrefetchScalarGridSpec(
            num_scalar_prefetch=0,
            grid=(n, n_hw_tiles),
            in_specs=[
                pl.BlockSpec((1, c, thw), lambda i, j: (i, 0, j)),
                pl.BlockSpec((1, 1, thw), lambda i, j: (i, 0, j)),
            ],
            out_specs=[
                pl.BlockSpec((1, c, 1), lambda i, j: (i, 0, 0)),
                pl.BlockSpec((1, c, 1), lambda i, j: (i, 0, 0)),
            ],
        ),
        compiler_params=pltpu.CompilerParams(
            dimension_semantics=("parallel", "arbitrary"),
            vmem_limit_bytes=32 * 1024 * 1024,
        ),
    )(x, lab)

    sums = jnp.sum(sums[..., 0], axis=0)   # (C,)
    cnts = jnp.sum(cnts[..., 0], axis=0)   # (C,)
    class_idx = jnp.arange(c)
    valid = (cnts > 0) & (class_idx != ignore_index)
    per_class_mean = jnp.where(valid, sums / jnp.maximum(cnts, 1.0), 0.0)
    n_valid = jnp.sum(valid.astype(jnp.float32))
    # NOTE: n_valid == 0 (everything ignored) yields NaN, same as the reference.
    return jnp.sum(per_class_mean) / n_valid


def _ce_loss_reference(output, labels, ignore_index=IGNORE_INDEX):
    """Pure-JAX reference mirroring the PyTorch forward."""
    n, c = output.shape[:2]
    x = jnp.moveaxis(output, 1, -1).reshape(-1, c).astype(jnp.float32)
    lab = labels.reshape(-1).astype(jnp.int32)
    lse = jax.scipy.special.logsumexp(x, axis=-1)
    picked = jnp.take_along_axis(x, jnp.clip(lab, 0, c - 1)[:, None], axis=-1)[:, 0]
    loss = lse - picked
    total = 0.0
    n_valid = 0.0
    for i in range(c):
        if i == ignore_index:
            continue
        msk = (lab == i).astype(jnp.float32)
        cnt = jnp.sum(msk)
        total = total + jnp.where(cnt > 0, jnp.sum(loss * msk) / jnp.maximum(cnt, 1.0), 0.0)
        n_valid = n_valid + jnp.where(cnt > 0, 1.0, 0.0)
    return total / n_valid


if __name__ == "__main__":
    key = jax.random.PRNGKey(0)
    k1, k2, k3 = jax.random.split(key, 3)

    N, C, H, W = 2, 4, 16, 16
    output = jax.random.normal(k1, (N, C, H, W), dtype=jnp.float32)
    labels = jax.random.randint(k2, (N, 1, H, W), 0, C, dtype=jnp.int32)

    loss = ce_loss(output, labels)
    loss = jax.block_until_ready(loss)
    ref = _ce_loss_reference(output, labels)
    assert jnp.isfinite(loss), "loss is not finite"
    assert jnp.allclose(loss, ref, rtol=1e-5, atol=1e-5), (loss, ref)

    # Same shapes with some pixels set to ignore_index.
    drop = jax.random.uniform(k3, (N, 1, H, W)) < 0.1
    labels_ig = jnp.where(drop, jnp.int32(IGNORE_INDEX), labels)
    loss_ig = jax.block_until_ready(ce_loss(output, labels_ig))
    ref_ig = _ce_loss_reference(output, labels_ig)
    assert jnp.allclose(loss_ig, ref_ig, rtol=1e-5, atol=1e-5), (loss_ig, ref_ig)

    print("KERNEL_OK")
</pallas_src>

<mosaic_0001>
module attributes {stable_mosaic.version = 11 : i64} {
  func.func @_ce_class_reduce_kernel(%arg0: i32, %arg1: i32, %arg2: memref<1x4x256xf32, #tpu.memory_space<vmem>>, %arg3: memref<1x1x256xi32, #tpu.memory_space<vmem>>, %arg4: memref<1x4x1xf32, #tpu.memory_space<vmem>>, %arg5: memref<1x4x1xf32, #tpu.memory_space<vmem>>) attributes {dimension_semantics = [#tpu.dimension_semantics<parallel>, #tpu.dimension_semantics<arbitrary>], iteration_bounds = array<i64: 2, 1>, scalar_prefetch = 0 : i64, scratch_operands = 0 : i64, tpu.core_type = #tpu.core_type<tc>, window_params = [{transform_indices = @transform_0, window_bounds = array<i64: 1, 4, 256>}, {transform_indices = @transform_1, window_bounds = array<i64: 1, 1, 256>}, {transform_indices = @transform_2, window_bounds = array<i64: 1, 4, 1>}, {transform_indices = @transform_3, window_bounds = array<i64: 1, 4, 1>}]} {
    %c0_i32 = arith.constant 0 : i32
    %0 = arith.cmpi eq, %arg1, %c0_i32 : i32
    %1 = arith.extui %0 : i1 to i32
    %c0_i32_0 = arith.constant 0 : i32
    %2 = arith.cmpi ne, %1, %c0_i32_0 : i32
    scf.if %2 {
      %cst_25 = arith.constant 0.000000e+00 : f32
      %54 = vector.broadcast %cst_25 : f32 to vector<1x4x1xf32>
      %c0_26 = arith.constant 0 : index
      %c0_27 = arith.constant 0 : index
      %c0_28 = arith.constant 0 : index
      %55 = vector.load %arg4[%c0_26, %c0_27, %c0_28] : memref<1x4x1xf32, #tpu.memory_space<vmem>>, vector<1x4x1xf32>
      tpu.vector_store %arg4[%c0_26, %c0_27, %c0_28], %54 {strides = array<i32>} : memref<1x4x1xf32, #tpu.memory_space<vmem>>, vector<1x4x1xf32>,
      %cst_29 = arith.constant 0.000000e+00 : f32
      %56 = vector.broadcast %cst_29 : f32 to vector<1x4x1xf32>
      %c0_30 = arith.constant 0 : index
      %c0_31 = arith.constant 0 : index
      %c0_32 = arith.constant 0 : index
      %57 = vector.load %arg5[%c0_30, %c0_31, %c0_32] : memref<1x4x1xf32, #tpu.memory_space<vmem>>, vector<1x4x1xf32>
      tpu.vector_store %arg5[%c0_30, %c0_31, %c0_32], %56 {strides = array<i32>} : memref<1x4x1xf32, #tpu.memory_space<vmem>>, vector<1x4x1xf32>,
    } else {
    }
    %c0 = arith.constant 0 : index
    %c0_1 = arith.constant 0 : index
    %c0_2 = arith.constant 0 : index
    %3 = vector.load %arg2[%c0, %c0_1, %c0_2] : memref<1x4x256xf32, #tpu.memory_space<vmem>>, vector<1x4x256xf32>
    %4 = vector.shape_cast %3 : vector<1x4x256xf32> to vector<4x256xf32>
    %c0_3 = arith.constant 0 : index
    %c0_4 = arith.constant 0 : index
    %c0_5 = arith.constant 0 : index
    %5 = vector.load %arg3[%c0_3, %c0_4, %c0_5] : memref<1x1x256xi32, #tpu.memory_space<vmem>>, vector<1x1x256xi32>
    %6 = vector.shape_cast %5 : vector<1x1x256xi32> to vector<1x256xi32>
    %7 = tpu.iota {dimensions = array<i32: 1>} : vector<1x256xi32>
    %c256_i32 = arith.constant 256 : i32
    %8 = arith.muli %arg1, %c256_i32 : i32
    %9 = vector.broadcast %8 : i32 to vector<1x256xi32>
    %10 = arith.addi %7, %9 : vector<1x256xi32>
    %c256_i32_6 = arith.constant 256 : i32
    %11 = vector.broadcast %c256_i32_6 : i32 to vector<1x256xi32>
    %12 = arith.cmpi slt, %10, %11 : vector<1x256xi32>
    %13 = tpu.iota {dimensions = array<i32: 0>} : vector<4x256xi32>
    %14 = vector.broadcast %6 : vector<1x256xi32> to vector<4x256xi32>
    %15 = arith.cmpi eq, %13, %14 : vector<4x256xi32>
    %16 = vector.broadcast %12 : vector<1x256xi1> to vector<4x256xi1>
    %17 = arith.andi %15, %16 : vector<4x256xi1>
    %cst = arith.constant dense<0xFF800000> : vector<256xf32>
    %18 = vector.multi_reduction <maximumf>, %4, %cst [0] : vector<4x256xf32> to vector<256xf32>
    %19 = vector.shape_cast %18 : vector<256xf32> to vector<1x256xf32>
    %20 = vector.broadcast %19 : vector<1x256xf32> to vector<4x256xf32>
    %21 = arith.subf %4, %20 : vector<4x256xf32>
    %22 = math.exp %21 : vector<4x256xf32>
    %cst_7 = arith.constant dense<0.000000e+00> : vector<256xf32>
    %23 = vector.multi_reduction <add>, %22, %cst_7 [0] : vector<4x256xf32> to vector<256xf32>
    %24 = vector.shape_cast %23 : vector<256xf32> to vector<1x256xf32>
    %25 = math.log %24 : vector<1x256xf32>
    %26 = arith.addf %19, %25 : vector<1x256xf32>
    %cst_8 = arith.constant 0.000000e+00 : f32
    %27 = vector.broadcast %cst_8 : f32 to vector<4x256xf32>
    %28 = arith.select %17, %4, %27 : vector<4x256xi1>, vector<4x256xf32>
    %cst_9 = arith.constant dense<0.000000e+00> : vector<256xf32>
    %29 = vector.multi_reduction <add>, %28, %cst_9 [0] : vector<4x256xf32> to vector<256xf32>
    %30 = vector.shape_cast %29 : vector<256xf32> to vector<1x256xf32>
    %31 = arith.subf %26, %30 : vector<1x256xf32>
    %cst_10 = arith.constant 0.000000e+00 : f32
    %32 = vector.broadcast %cst_10 : f32 to vector<1x256xf32>
    %33 = arith.select %12, %31, %32 : vector<1x256xi1>, vector<1x256xf32>
    %34 = arith.extui %17 : vector<4x256xi1> to vector<4x256xi32>
    %35 = arith.sitofp %34 : vector<4x256xi32> to vector<4x256xf32>
    %c0_11 = arith.constant 0 : index
    %c0_12 = arith.constant 0 : index
    %c0_13 = arith.constant 0 : index
    %36 = vector.load %arg4[%c0_11, %c0_12, %c0_13] : memref<1x4x1xf32, #tpu.memory_space<vmem>>, vector<1x4x1xf32>
    %37 = vector.shape_cast %36 : vector<1x4x1xf32> to vector<4x1xf32>
    %38 = vector.broadcast %33 : vector<1x256xf32> to vector<4x256xf32>
    %39 = arith.mulf %35, %38 : vector<4x256xf32>
    %cst_14 = arith.constant dense<0.000000e+00> : vector<4xf32>
    %40 = vector.multi_reduction <add>, %39, %cst_14 [1] : vector<4x256xf32> to vector<4xf32>
    %41 = vector.shape_cast %40 : vector<4xf32> to vector<4x1xf32>
    %42 = arith.addf %37, %41 : vector<4x1xf32>
    %c0_15 = arith.constant 0 : index
    %c0_16 = arith.constant 0 : index
    %c0_17 = arith.constant 0 : index
    %43 = vector.load %arg4[%c0_15, %c0_16, %c0_17] : memref<1x4x1xf32, #tpu.memory_space<vmem>>, vector<1x4x1xf32>
    %44 = vector.shape_cast %43 : vector<1x4x1xf32> to vector<4x1xf32>
    %45 = vector.shape_cast %42 : vector<4x1xf32> to vector<1x4x1xf32>
    tpu.vector_store %arg4[%c0_15, %c0_16, %c0_17], %45 {strides = array<i32>} : memref<1x4x1xf32, #tpu.memory_space<vmem>>, vector<1x4x1xf32>,
    %c0_18 = arith.constant 0 : index
    %c0_19 = arith.constant 0 : index
    %c0_20 = arith.constant 0 : index
    %46 = vector.load %arg5[%c0_18, %c0_19, %c0_20] : memref<1x4x1xf32, #tpu.memory_space<vmem>>, vector<1x4x1xf32>
    %47 = vector.shape_cast %46 : vector<1x4x1xf32> to vector<4x1xf32>
    %cst_21 = arith.constant dense<0.000000e+00> : vector<4xf32>
    %48 = vector.multi_reduction <add>, %35, %cst_21 [1] : vector<4x256xf32> to vector<4xf32>
    %49 = vector.shape_cast %48 : vector<4xf32> to vector<4x1xf32>
    %50 = arith.addf %47, %49 : vector<4x1xf32>
    %c0_22 = arith.constant 0 : index
    %c0_23 = arith.constant 0 : index
    %c0_24 = arith.constant 0 : index
    %51 = vector.load %arg5[%c0_22, %c0_23, %c0_24] : memref<1x4x1xf32, #tpu.memory_space<vmem>>, vector<1x4x1xf32>
    %52 = vector.shape_cast %51 : vector<1x4x1xf32> to vector<4x1xf32>
    %53 = vector.shape_cast %50 : vector<4x1xf32> to vector<1x4x1xf32>
    tpu.vector_store %arg5[%c0_22, %c0_23, %c0_24], %53 {strides = array<i32>} : memref<1x4x1xf32, #tpu.memory_space<vmem>>, vector<1x4x1xf32>,
    return
  }
  func.func @transform_0(%arg0: i32, %arg1: i32) -> (i32, i32, i32) {
    %c0_i32 = arith.constant 0 : i32
    %c0_i32_0 = arith.constant 0 : i32
    return %arg0, %c0_i32, %arg1 : i32, i32, i32
  }
  func.func @transform_1(%arg0: i32, %arg1: i32) -> (i32, i32, i32) {
    %c0_i32 = arith.constant 0 : i32
    %c0_i32_0 = arith.constant 0 : i32
    return %arg0, %c0_i32, %arg1 : i32, i32, i32
  }
  func.func @transform_2(%arg0: i32, %arg1: i32) -> (i32, i32, i32) {
    %c0_i32 = arith.constant 0 : i32
    %c0_i32_0 = arith.constant 0 : i32
    %c0_i32_1 = arith.constant 0 : i32
    return %arg0, %c0_i32, %c0_i32_0 : i32, i32, i32
  }
  func.func @transform_3(%arg0: i32, %arg1: i32) -> (i32, i32, i32) {
    %c0_i32 = arith.constant 0 : i32
    %c0_i32_0 = arith.constant 0 : i32
    %c0_i32_1 = arith.constant 0 : i32
    return %arg0, %c0_i32, %c0_i32_0 : i32, i32, i32
  }
}

</mosaic_0001>

<llo_original>
// kernel: ce_loss.1
$region0: #{ce_loss.1}
  #allocation0 [shape = 'u32[]', space=smem, size = 0x4, offset = 0x4, fixed_abs, tag = 'smem constant byte address 0x4 - core index']
  #allocation1 [shape = 'u32[144,128]{1,0:T(1,128)}', space=vmem, size = 0x12000, scoped, tag = 'internal scratch']
  %s0 = inlined_call_operand.vmem [shape: f32[2,4,256], index: 0, kind: input, shape index: {}]
  %s1 = inlined_call_operand.vmem [shape: s32[2,1,256], index: 1, kind: input, shape index: {}]
  %s2 = inlined_call_operand.vmem [shape: f32[2,4,1], index: 2, kind: output, shape index: {0}]
  %s3 = inlined_call_operand.vmem [shape: f32[2,4,1], index: 3, kind: output, shape index: {1}]
  %4 = xla_tuple %s2, %s3
  %s5 = sld [smem:[#allocation0]]
  $region53: #{ce_loss.1} parent=0
    _
  %s7 = ssub.s32 1, %s5
  %s8 = scalar_select 0, %s7, %s5
  loop: start=0, step=1, limit=4
  $region2: #{ce_loss.1} parent=0 // loop_pre_header
    _
  $region3: #{ce_loss.1} parent=0 // loop_header
    %s10 = sphi 0, %s14
    %p11 = scmp.ge.s32.totalorder %s10, 4
    %s17 = sphi 0, %s29
    %s18 = sphi 0, %s25
    %s19 = sphi 0, %s17
    %s20 = sphi 0, %s18
    %s21 = sphi 0, %s19
    %s22 = sphi 0, %s20
    %s34 = sphi 0, %s36
    %s37 = sphi 0, %s34
    %s38 = sphi 0, %s37
    %s54 = sphi 0, %s38
    %s62 = sphi 0, %s64
    %s65 = sphi 0, %s62
    %s66 = sphi 0, %s65
    %s82 = sphi 0, %s66
    %s88 = sphi 0, %s90
    %s91 = sphi 0, %s88
    %s92 = sphi 0, %s91
    %s108 = sphi 0, %s92
    %s114 = sphi 0, %s116
    %s117 = sphi 0, %s114
    %s118 = sphi 0, %s117
    %s134 = sphi 0, %s118
  $region4: #{ce_loss.1} parent=0 // loop_header_branch
    %13 = sbr.rel (%p11) target = $region8
  $region5: #{ce_loss.1} parent=0 // loop_body
    %s15 = ssub.s32 %s10, 1
    %s16 = ssub.s32 %s10, 2
    %s23 = sadd.s32 1, %s18
    %p24 = scmp.ge.s32.totalorder %s23, 1
    %s25 = scalar_select %p24, 0, %s23
    %s26 = sadd.s32 1, %s17
    %s27 = scalar_select %p24, %s26, %s17
    %p28 = scmp.ge.s32.totalorder %s27, 2
    %s29 = scalar_select %p28, 0, %s27
    %s30 = ssub.s32 %s17, %s29
    %s31 = ssub.s32 %s18, %s25
    %s32 = sor.u32 %s30, %s31
    %p33 = scmp.eq.s32.totalorder %s32, 0
    %s35 = sadd.s32 %s34, 1
    %s36 = scalar_select %p33, %s34, %s35
    %p39 = pneg %p33
    %p40 = scmp.eq.s32.totalorder %s10, 1
    %p41 = por %p39, %p40
    %p42 = scmp.ne.s32.totalorder %s34, %s37
    %p43 = scmp.eq.s32.totalorder %s10, 0
    %p44 = por %p42, %p43
    %p45 = scmp.ne.s32.totalorder %s34, %s37
    %p46 = scmp.eq.s32.totalorder %s15, 1
    %p47 = por %p45, %p46
    %p48 = scmp.ne.s32.totalorder %s37, %s38
    %p49 = scmp.eq.s32.totalorder %s15, 0
    %p50 = por %p48, %p49
    %p51 = scmp.ne.s32.totalorder %s37, %s38
    %p52 = scmp.eq.s32.totalorder %s16, 1
    %p53 = por %p51, %p52
    %p55 = scmp.ne.s32.totalorder %s38, %s54
    %p56 = scmp.eq.s32.totalorder %s16, 0
    %p57 = por %p55, %p56
    %s58 = ssub.s32 %s17, %s29
    %s59 = ssub.s32 %s18, %s25
    %s60 = sor.u32 %s58, %s59
    %p61 = scmp.eq.s32.totalorder %s60, 0
    %s63 = sadd.s32 %s62, 1
    %s64 = scalar_select %p61, %s62, %s63
    %p67 = pneg %p61
    %p68 = scmp.eq.s32.totalorder %s10, 1
    %p69 = por %p67, %p68
    %p70 = scmp.ne.s32.totalorder %s62, %s65
    %p71 = scmp.eq.s32.totalorder %s10, 0
    %p72 = por %p70, %p71
    %p73 = scmp.ne.s32.totalorder %s62, %s65
    %p74 = scmp.eq.s32.totalorder %s15, 1
    %p75 = por %p73, %p74
    %p76 = scmp.ne.s32.totalorder %s65, %s66
    %p77 = scmp.eq.s32.totalorder %s15, 0
    %p78 = por %p76, %p77
    %p79 = scmp.ne.s32.totalorder %s65, %s66
    %p80 = scmp.eq.s32.totalorder %s16, 1
    %p81 = por %p79, %p80
    %p83 = scmp.ne.s32.totalorder %s66, %s82
    %p84 = scmp.eq.s32.totalorder %s16, 0
    %p85 = por %p83, %p84
    %s86 = ssub.s32 %s17, %s29
    %p87 = scmp.eq.s32.totalorder %s86, 0
    %s89 = sadd.s32 %s88, 1
    %s90 = scalar_select %p87, %s88, %s89
    %p93 = pneg %p87
    %p94 = scmp.eq.s32.totalorder %s10, 1
    %p95 = por %p93, %p94
    %p96 = scmp.ne.s32.totalorder %s88, %s91
    %p97 = scmp.eq.s32.totalorder %s10, 0
    %p98 = por %p96, %p97
    %p99 = scmp.ne.s32.totalorder %s88, %s91
    %p100 = scmp.eq.s32.totalorder %s15, 1
    %p101 = por %p99, %p100
    %p102 = scmp.ne.s32.totalorder %s91, %s92
    %p103 = scmp.eq.s32.totalorder %s15, 0
    %p104 = por %p102, %p103
    %p105 = scmp.ne.s32.totalorder %s91, %s92
    %p106 = scmp.eq.s32.totalorder %s16, 1
    %p107 = por %p105, %p106
    %p109 = scmp.ne.s32.totalorder %s92, %s108
    %p110 = scmp.eq.s32.totalorder %s16, 0
    %p111 = por %p109, %p110
    %s112 = ssub.s32 %s17, %s29
    %p113 = scmp.eq.s32.totalorder %s112, 0
    %s115 = sadd.s32 %s114, 1
    %s116 = scalar_select %p113, %s114, %s115
    %p119 = pneg %p113
    %p120 = scmp.eq.s32.totalorder %s10, 1
    %p121 = por %p119, %p120
    %p122 = scmp.ne.s32.totalorder %s114, %s117
    %p123 = scmp.eq.s32.totalorder %s10, 0
    %p124 = por %p122, %p123
    %p125 = scmp.ne.s32.totalorder %s114, %s117
    %p126 = scmp.eq.s32.totalorder %s15, 1
    %p127 = por %p125, %p126
    %p128 = scmp.ne.s32.totalorder %s117, %s118
    %p129 = scmp.eq.s32.totalorder %s15, 0
    %p130 = por %p128, %p129
    %p131 = scmp.ne.s32.totalorder %s117, %s118
    %p132 = scmp.eq.s32.totalorder %s16, 1
    %p133 = por %p131, %p132
    %p135 = scmp.ne.s32.totalorder %s118, %s134
    %p136 = scmp.eq.s32.totalorder %s16, 0
    %p137 = por %p135, %p136
    %p138 = scmp.le.s32.totalorder 1, %s10
    %p139 = scmp.lt.s32.totalorder %s10, 3
    %p140 = pnand %p138, %p139
    %p141 = pneg %p140
    // Predicated region
    $region9: #{ce_loss.1} parent=5 // pred_check
      _
    $region10: #{ce_loss.1} parent=5 // pred_check_branch
      %143 = sbr.rel (%p140) target = $region12
    $region11: #{ce_loss.1} parent=5 // pred_region
      %s144 = ssub.s32 %s10, 1
    $region12: #{ce_loss.1} parent=5 // pred_fallthru
      _
    %p145 = scmp.lt.s32.totalorder %s10, 2
    // Predicated region
    $region13: #{ce_loss.1} parent=5 // pred_check
      %p146 = pneg %p145
    $region14: #{ce_loss.1} parent=5 // pred_check_branch
      %148 = sbr.rel (%p146) target = $region16
    $region15: #{ce_loss.1} parent=5 // pred_region
      // Predicated region
      $region17: #{ce_loss.1} parent=15 // pred_check
        %p149 = pneg %p44
      $region18: #{ce_loss.1} parent=15 // pred_check_branch
        %151 = sbr.rel (%p149) target = $region20
      $region19: #{ce_loss.1} parent=15 // pred_region
        %s152 = smul.u32 2, %s18
        %p153 = scmp.lt.s32.totalorder %s17, 1
        %s154 = scalar_select %p153, %s17, 1
        %p155 = scmp.lt.s32.totalorder %s152, 1
        %s156 = scalar_select %p155, %s152, 1
        %s157 = smul.addr %s154, 2
        %s158 = sadd.s32 %s156, %s157
        %s159 = smul.addr %s158, 4
        %s160 = scalar_lea.vmem %s0, %s159
        %s161 = smul.u32 2, %s18
      $region20: #{ce_loss.1} parent=15 // pred_fallthru
        _
      // Predicated region
      $region21: #{ce_loss.1} parent=15 // pred_check
        %p162 = pneg %p72
      $region22: #{ce_loss.1} parent=15 // pred_check_branch
        %164 = sbr.rel (%p162) target = $region24
      $region23: #{ce_loss.1} parent=15 // pred_region
        %s165 = smul.u32 2, %s18
        %p166 = scmp.lt.s32.totalorder %s17, 1
        %s167 = scalar_select %p166, %s17, 1
        %p168 = scmp.lt.s32.totalorder %s165, 1
        %s169 = scalar_select %p168, %s165, 1
        %s170 = smul.addr %s167, 2
        %s171 = sadd.s32 %s169, %s170
        %s172 = scalar_lea.vmem %s1, %s171
        %s173 = smul.u32 2, %s18
      $region24: #{ce_loss.1} parent=15 // pred_fallthru
        _
    $region16: #{ce_loss.1} parent=5 // pred_fallthru
      _
    %p174 = scmp.le.s32.totalorder 1, %s10
    %p175 = scmp.lt.s32.totalorder %s10, 3
    %p176 = pnand %p174, %p175
    %p177 = pneg %p176
    // Predicated region
    $region25: #{ce_loss.1} parent=5 // pred_check
      _
    $region26: #{ce_loss.1} parent=5 // pred_check_branch
      %179 = sbr.rel (%p176) target = $region28
    $region27: #{ce_loss.1} parent=5 // pred_region
      %s180 = ssub.s32 %s10, 1
      %s181 = smul.u32 2, %s20
      %p182 = scmp.lt.s32.totalorder %s19, 1
      %s183 = scalar_select %p182, %s19, 1
      %p184 = scmp.lt.s32.totalorder %s181, 1
      %s185 = scalar_select %p184, %s181, 1
      %s186 = smul.addr %s183, 2
      %s187 = sadd.s32 %s185, %s186
      %s188 = smul.addr %s187, 4
      %s189 = scalar_lea.vmem %s0, %s188
      %p190 = pneg %p50
      %p191 = pneg %p47
      %s192 = smul.u32 2, %s20
      %p193 = scmp.lt.s32.totalorder %s19, 1
      %s194 = scalar_select %p193, %s19, 1
      %p195 = scmp.lt.s32.totalorder %s192, 1
      %s196 = scalar_select %p195, %s192, 1
      %s197 = smul.addr %s194, 2
      %s198 = sadd.s32 %s196, %s197
      %s199 = scalar_lea.vmem %s1, %s198
      %p200 = pneg %p78
      %p201 = pneg %p75
      %p202 = pneg %p104
      %p203 = pneg %p101
      %p204 = scmp.lt.s32.totalorder %s19, 1
      %s205 = scalar_select %p204, %s19, 1
      %s206 = smul.addr %s205, 4
      %s207 = scalar_lea.vmem %s2, %s206
      %p208 = pneg %p130
      %p209 = pneg %p127
      %p210 = scmp.lt.s32.totalorder %s19, 1
      %s211 = scalar_select %p210, %s19, 1
      %s212 = smul.addr %s211, 4
      %s213 = scalar_lea.vmem %s3, %s212
      %s214 = smul.u32 2, %s20
      %p215 = scmp.lt.s32.totalorder %s19, 1
      %s216 = scalar_select %p215, %s19, 1
      %p217 = scmp.lt.s32.totalorder %s214, 1
      %s218 = scalar_select %p217, %s214, 1
      %s219 = smul.addr %s216, 2
      %s220 = sadd.s32 %s218, %s219
      %s221 = smul.addr %s220, 4
      %s222 = scalar_lea.vmem %s0, %s221
      %s223 = smul.u32 2, %s20
      %s224 = smul.u32 2, %s20
      %p225 = scmp.lt.s32.totalorder %s19, 1
      %s226 = scalar_select %p225, %s19, 1
      %p227 = scmp.lt.s32.totalorder %s224, 1
      %s228 = scalar_select %p227, %s224, 1
      %s229 = smul.addr %s226, 2
      %s230 = sadd.s32 %s228, %s229
      %s231 = scalar_lea.vmem %s1, %s230
      %s232 = smul.u32 2, %s20
      %p233 = scmp.lt.s32.totalorder %s19, 1
      %s234 = scalar_select %p233, %s19, 1
      %s235 = smul.addr %s234, 4
      %s236 = scalar_lea.vmem %s2, %s235
      %p237 = scmp.lt.s32.totalorder %s19, 1
      %s238 = scalar_select %p237, %s19, 1
      %s239 = smul.addr %s238, 4
      %s240 = scalar_lea.vmem %s3, %s239
      %p241 = scmp.eq.s32.totalorder %s20, 0
      // Predicated region
      $region29: #{ce_loss.1} parent=27 // pred_check
        %p242 = pneg %p241
      $region30: #{ce_loss.1} parent=27 // pred_check_branch
        %244 = sbr.rel (%p242) target = $region32
      $region31: #{ce_loss.1} parent=27 // pred_region
        %vm245 = vcmask 3072
        %246 = vst.msk [vmem:[%s236] sm:$0xf] %vm245, 0.0
        %247 = vst.msk [vmem:[%s240] sm:$0xf] %vm245, 0.0
      $region32: #{ce_loss.1} parent=27 // pred_fallthru
        _
      %v248 = vld [vmem:[%s222] sm:$0xff]
      %v249 = vld [vmem:[%s231] sm:$0x3]
      %v250 = vlaneseq
      %v251 = vand.u32 %v250, 127
      %v252 = vadd.s32 %v251, 128
      %s253 = smul.u32 %s20, 256
      %v254 = vstv %s253
      %v255 = vadd.s32 %v251, %v254
      %v256 = vadd.s32 %v252, %v254
      %vm257 = vcmp.lt.s32.totalorder %v255, 256
      %vm258 = vcmp.lt.s32.totalorder %v256, 256
      %v259 = vlaneseq
      %v260 = vshrl.u32 %v259, 7
      %v261 = vlaneseq
      %v262 = vshrl.u32 %v261, 7
      %v263 = vsub.s32 0, %v262
      %v264 = vrot.slane %v249, %v263
      %v265 = vlaneseq
      %v266 = vshrl.u32 %v265, 7
      %v267 = vsub.s32 1, %v266
      %v268 = vrot.slane %v249, %v267
      %vm269 = vcmp.eq.s32.totalorder %v260, %v264
      %vm270 = vcmp.eq.s32.totalorder %v260, %v268
      %v271 = vsel %vm257, 1, 0
      %v272 = vsel %vm258, 1, 0
      %vm273 = vcmp.eq.s32.totalorder %v271, 1
      %vm274 = vcmp.eq.s32.totalorder %v272, 1
      %vm275 = vmand %vm269, %vm273
      %vm276 = vmand %vm270, %vm274
      %v278 = vcombine.high %v248, %v248
      %vm280 = vcmask 1043456
      %v281 = vsel %vm280, %v248, -inf
      %v282 = vrot.slane %v281, 4
      %v283 = vmax.f32 %v281, %v282
      %v284 = vrot.slane %v283, 2
      %v285 = vmax.f32 %v283, %v284
      %v286 = vrot.slane %v285, 1
      %v287 = vmax.f32 %v285, %v286
      %v288 = vsel %vm280, %v278, -inf
      %v289 = vrot.slane %v288, 4
      %v290 = vmax.f32 %v288, %v289
      %v291 = vrot.slane %v290, 2
      %v292 = vmax.f32 %v290, %v291
      %v293 = vrot.slane %v292, 1
      %v294 = vmax.f32 %v292, %v293
      %v297 = vcombine.low %v287, %v294
      %v299 = vsub.f32 %v248, %v297
      %v300 = vmul.f32 %v299, 1.442695
      %v301 = vpow.pop %v300
      %v303 = vcombine.high %v301, %v301
      %v305 = vsel %vm280, %v301, 0.0
      %v306 = vrot.slane %v305, 4
      %v307 = vadd.f32 %v305, %v306
      %v308 = vrot.slane %v307, 2
      %v309 = vadd.f32 %v307, %v308
      %v310 = vrot.slane %v309, 1
      %v311 = vadd.f32 %v309, %v310
      %v312 = vsel %vm280, %v303, 0.0
      %v313 = vrot.slane %v312, 4
      %v314 = vadd.f32 %v312, %v313
      %v315 = vrot.slane %v314, 2
      %v316 = vadd.f32 %v314, %v315
      %v317 = vrot.slane %v316, 1
      %v318 = vadd.f32 %v316, %v317
      %v319 = vlog2.pop %v311
      %v320 = vmul.f32 %v319, 0.6931472
      %v321 = vlog2.pop %v318
      %v322 = vmul.f32 %v321, 0.6931472
      %v323 = vadd.f32 %v287, %v320
      %v324 = vadd.f32 %v294, %v322
      %v325 = vsel %vm275, %v248, 0.0
      %v326 = vsel %vm276, %v278, 0.0
      %v327 = vsel %vm280, %v325, 0.0
      %v328 = vrot.slane %v327, 4
      %v329 = vadd.f32 %v327, %v328
      %v330 = vrot.slane %v329, 2
      %v331 = vadd.f32 %v329, %v330
      %v332 = vrot.slane %v331, 1
      %v333 = vadd.f32 %v331, %v332
      %v334 = vsel %vm280, %v326, 0.0
      %v335 = vrot.slane %v334, 4
      %v336 = vadd.f32 %v334, %v335
      %v337 = vrot.slane %v336, 2
      %v338 = vadd.f32 %v336, %v337
      %v339 = vrot.slane %v338, 1
      %v340 = vadd.f32 %v338, %v339
      %v341 = vsub.f32 %v323, %v333
      %v342 = vsub.f32 %v324, %v340
      %v343 = vsel %vm257, %v341, 0.0
      %v344 = vsel %vm258, %v342, 0.0
      %v345 = vsel %vm275, 1, 0
      %v346 = vsel %vm276, 1, 0
      %v347 = vcvt.s32.f32 %v345
      %v348 = vcvt.s32.f32 %v346
      %v349 = vld [vmem:[%s236] sm:$0xf]
      %v350 = vmul.f32 %v347, %v343
      %v351 = vmul.f32 %v348, %v344
      %v352 = vsel %vm280, %v350, 0.0
      %v353 = vsel %vm280, %v351, 0.0
      %v354 = vadd.f32 %v352, %v353
      %355 = vadd.xlane.f32.xlu0 %v354
      %v356 = vpop.xlane.xlu0 %355
      %v357 = vadd.f32 %v349, %v356
      %vm358 = vcmask 3072
      %359 = vst.msk [vmem:[%s236] sm:$0xf] %vm358, %v357
      %v360 = vld [vmem:[%s240] sm:$0xf]
      %v361 = vsel %vm280, %v347, 0.0
      %v362 = vsel %vm280, %v348, 0.0
      %v363 = vadd.f32 %v361, %v362
      %364 = vadd.xlane.f32.xlu0 %v363
      %v365 = vpop.xlane.xlu0 %364
      %v366 = vadd.f32 %v360, %v365
      %367 = vst.msk [vmem:[%s240] sm:$0xf] %vm358, %v366
      %p368 = scmp.lt.s32.totalorder %s19, 1
      %s369 = scalar_select %p368, %s19, 1
      %s370 = smul.addr %s369, 4
      %s371 = scalar_lea.vmem %s2, %s370
      %p372 = scmp.lt.s32.totalorder %s19, 1
      %s373 = scalar_select %p372, %s19, 1
      %s374 = smul.addr %s373, 4
      %s375 = scalar_lea.vmem %s3, %s374
      // Predicated region
      $region33: #{ce_loss.1} parent=27 // pred_check
        %p376 = pneg %p101
      $region34: #{ce_loss.1} parent=27 // pred_check_branch
        %378 = sbr.rel (%p376) target = $region36
      $region35: #{ce_loss.1} parent=27 // pred_region
        _
      $region36: #{ce_loss.1} parent=27 // pred_fallthru
        _
      // Predicated region
      $region37: #{ce_loss.1} parent=27 // pred_check
        %p379 = pneg %p127
      $region38: #{ce_loss.1} parent=27 // pred_check_branch
        %381 = sbr.rel (%p379) target = $region40
      $region39: #{ce_loss.1} parent=27 // pred_region
        _
      $region40: #{ce_loss.1} parent=27 // pred_fallthru
        _
    $region28: #{ce_loss.1} parent=5 // pred_fallthru
      _
    %p382 = scmp.le.s32.totalorder 2, %s10
    // Predicated region
    $region41: #{ce_loss.1} parent=5 // pred_check
      %p383 = pneg %p382
    $region42: #{ce_loss.1} parent=5 // pred_check_branch
      %385 = sbr.rel (%p383) target = $region44
    $region43: #{ce_loss.1} parent=5 // pred_region
      %s386 = ssub.s32 %s10, 2
      // Predicated region
      $region45: #{ce_loss.1} parent=43 // pred_check
        %p387 = pneg %p107
      $region46: #{ce_loss.1} parent=43 // pred_check_branch
        %389 = sbr.rel (%p387) target = $region48
      $region47: #{ce_loss.1} parent=43 // pred_region
        %p390 = scmp.lt.s32.totalorder %s21, 1
        %s391 = scalar_select %p390, %s21, 1
        %s392 = smul.addr %s391, 4
        %s393 = scalar_lea.vmem %s2, %s392
      $region48: #{ce_loss.1} parent=43 // pred_fallthru
        _
      // Predicated region
      $region49: #{ce_loss.1} parent=43 // pred_check
        %p394 = pneg %p133
      $region50: #{ce_loss.1} parent=43 // pred_check_branch
        %396 = sbr.rel (%p394) target = $region52
      $region51: #{ce_loss.1} parent=43 // pred_region
        %p397 = scmp.lt.s32.totalorder %s21, 1
        %s398 = scalar_select %p397, %s21, 1
        %s399 = smul.addr %s398, 4
        %s400 = scalar_lea.vmem %s3, %s399
      $region52: #{ce_loss.1} parent=43 // pred_fallthru
        _
    $region44: #{ce_loss.1} parent=5 // pred_fallthru
      _
  $region6: #{ce_loss.1} parent=0 // loop_footer
    %s14 = sadd.s32 1, %s10
  $region7: #{ce_loss.1} parent=0 // loop_footer_branch
    %9 = sbr.rel target = $region3
  $region8: #{ce_loss.1} parent=0 // loop_exit
    _

</llo_original>
